<compile_context>
chip_gen: v7x
topology: tpu7x:2x2x1
jax: 0.10.0
libtpu: 0.0.40
codegen_flags: <defaults>
</compile_context>

<pallas_src>
import jax
import jax.numpy as jnp
from jax.experimental import pallas as pl
from jax.experimental.pallas import tpu as pltpu

EPS = 1e-5
_VMEM_LIMIT_BYTES = 32 * 1024 * 1024  # safe on v5e/v6e (128 MiB) and v7x (64 MiB)


# --------------------------- pass 1: statistics -------------------------------
def _stats_kernel(x_ref, sum_ref, sq_ref):
    """Accumulate per-batch sum(x) and sum(x^2) across T tiles (single read of x)."""
    kt = pl.program_id(1)

    @pl.when(kt == 0)
    def _():
        sum_ref[...] = jnp.zeros_like(sum_ref)
        sq_ref[...] = jnp.zeros_like(sq_ref)

    x = x_ref[...].astype(jnp.float32)        # (1, C, tile_t), f32 accumulation
    sum_ref[...] += jnp.sum(x)
    sq_ref[...] += jnp.sum(x * x)


# --------------------------- pass 2: normalize --------------------------------
def _norm_kernel(x_ref, scale_ref, shift_ref, o_ref):
    """out = x * scale + shift  (scale/shift precomputed per (batch, channel))."""
    x = x_ref[...].astype(jnp.float32)        # (1, C, tile_t)
    y = x * scale_ref[...] + shift_ref[...]   # single FMA per element
    o_ref[...] = y.astype(o_ref.dtype)


def _choose_tile(t):
    # Largest lane-dense tile (multiple of 128) up to 512; small T pads to 128.
    for cand in (512, 256, 128):
        if t >= cand:
            return cand
    return 128


def global_layer_norm(x, weight, bias, eps=EPS, tile_t=None):
    """x: (B, C, T); weight, bias: (C, 1).  Returns same shape/dtype as x."""
    B, C, T = x.shape
    if tile_t is None:
        tile_t = _choose_tile(T)
    n_t = pl.cdiv(T, tile_t)
    t_pad = n_t * tile_t

    if t_pad != T:
        # Zero padding is exact for sum / sum-of-squares; true N is used below.
        x_p = jnp.pad(x, ((0, 0), (0, 0), (0, t_pad - T)))
    else:
        x_p = x

    # ---- pass 1: per-batch sum and sum-of-squares (one read of x) ------------
    sum_x, sum_x2 = pl.pallas_call(
        _stats_kernel,
        out_shape=(jax.ShapeDtypeStruct((B, 1, 1), jnp.float32),
                   jax.ShapeDtypeStruct((B, 1, 1), jnp.float32)),
        grid=(B, n_t),
        in_specs=[pl.BlockSpec((1, C, tile_t), lambda b, k: (b, 0, k))],
        out_specs=(pl.BlockSpec((1, 1, 1), lambda b, k: (b, 0, 0)),
                   pl.BlockSpec((1, 1, 1), lambda b, k: (b, 0, 0))),
        compiler_params=pltpu.CompilerParams(
            dimension_semantics=("parallel", "arbitrary"),
            vmem_limit_bytes=_VMEM_LIMIT_BYTES),
    )(x_p)

    # ---- tiny per-(batch, channel) parameter math: hoisted, left to XLA ------
    n = C * T                                                   # true element count
    mean = sum_x[:, 0, 0] / n                                   # (B,)
    var = (sum_x2[:, 0, 0] - n * mean * mean) / (n - 1)         # unbiased (torch.std)
    var = jnp.maximum(var, 0.0)
    inv = 1.0 / (jnp.sqrt(var) + eps)                           # (B,)
    w = weight.reshape(1, C).astype(jnp.float32)
    bchan = bias.reshape(1, C).astype(jnp.float32)
    scale = w * inv[:, None]                                    # (B, C)
    shift = bchan - mean[:, None] * scale                       # (B, C)
    scale = scale[:, :, None]                                   # (B, C, 1)
    shift = shift[:, :, None]                                   # (B, C, 1)

    # ---- pass 2: lane-dense normalize (one read + one write of x) ------------
    out = pl.pallas_call(
        _norm_kernel,
        out_shape=jax.ShapeDtypeStruct((B, C, t_pad), x.dtype),
        grid=(B, n_t),
        in_specs=[pl.BlockSpec((1, C, tile_t), lambda b, k: (b, 0, k)),
                  pl.BlockSpec((1, C, 1), lambda b, k: (b, 0, 0)),
                  pl.BlockSpec((1, C, 1), lambda b, k: (b, 0, 0))],
        out_specs=pl.BlockSpec((1, C, tile_t), lambda b, k: (b, 0, k)),
        compiler_params=pltpu.CompilerParams(
            dimension_semantics=("parallel", "parallel"),
            vmem_limit_bytes=_VMEM_LIMIT_BYTES),
    )(x_p, scale, shift)

    if t_pad != T:
        out = out[:, :, :T]
    return out


# ---------------- pure-JAX reference (for a correctness check) ----------------
def reference_forward(x, weight, bias, eps=EPS):
    n = x.shape[1] * x.shape[2]
    mean = jnp.mean(x, axis=(1, 2), keepdims=True)
    diff = x - mean
    var = jnp.sum(diff * diff, axis=(1, 2), keepdims=True) / (n - 1)  # unbiased
    std = jnp.sqrt(var)
    y = diff / (std + eps)
    return weight[None] * y + bias[None]


if __name__ == "__main__":
    key = jax.random.PRNGKey(0)
    kx, kw, kb = jax.random.split(key, 3)

    # Small but tiling-exercising shapes: 2 T-tiles per batch + a ragged tail.
    B, C, T = 2, 16, 384
    x = jax.random.normal(kx, (B, C, T), jnp.float32)
    # Module init is weight=ones, bias=zeros; perturb so both paths are tested.
    weight = 1.0 + 0.1 * jax.random.normal(kw, (C, 1), jnp.float32)
    bias = 0.1 * jax.random.normal(kb, (C, 1), jnp.float32)

    # tile_t=256 -> grid=(2, 2) with the last tile zero-padded (384 -> 512).
    out = jax.block_until_ready(global_layer_norm(x, weight, bias, tile_t=256))
    ref = reference_forward(x, weight, bias)

    assert out.shape == (B, C, T)
    assert out.dtype == x.dtype
    err = float(jnp.max(jnp.abs(out - ref)))
    assert jnp.allclose(out, ref, atol=1e-4, rtol=1e-4), err

    print("KERNEL_OK")
</pallas_src>

<mosaic_0001>
module attributes {stable_mosaic.version = 11 : i64} {
  func.func @_stats_kernel(%arg0: i32, %arg1: i32, %arg2: memref<1x16x256xf32, #tpu.memory_space<vmem>>, %arg3: memref<1x1x1xf32, #tpu.memory_space<vmem>>, %arg4: memref<1x1x1xf32, #tpu.memory_space<vmem>>) attributes {dimension_semantics = [#tpu.dimension_semantics<parallel>, #tpu.dimension_semantics<arbitrary>], iteration_bounds = array<i64: 2, 2>, scalar_prefetch = 0 : i64, scratch_operands = 0 : i64, tpu.core_type = #tpu.core_type<tc>, window_params = [{transform_indices = @transform_0, window_bounds = array<i64: 1, 16, 256>}, {transform_indices = @transform_1, window_bounds = array<i64: 1, 1, 1>}, {transform_indices = @transform_2, window_bounds = array<i64: 1, 1, 1>}]} {
    %c0_i32 = arith.constant 0 : i32
    %0 = arith.cmpi eq, %arg1, %c0_i32 : i32
    %1 = arith.extui %0 : i1 to i32
    %c0_i32_0 = arith.constant 0 : i32
    %2 = arith.cmpi ne, %1, %c0_i32_0 : i32
    scf.if %2 {
      %cst_16 = arith.constant 0.000000e+00 : f32
      %21 = vector.broadcast %cst_16 : f32 to vector<1x1x1xf32>
      %c0_17 = arith.constant 0 : index
      %c0_18 = arith.constant 0 : index
      %c0_19 = arith.constant 0 : index
      %22 = vector.load %arg3[%c0_17, %c0_18, %c0_19] : memref<1x1x1xf32, #tpu.memory_space<vmem>>, vector<1x1x1xf32>
      tpu.vector_store %arg3[%c0_17, %c0_18, %c0_19], %21 {strides = array<i32>} : memref<1x1x1xf32, #tpu.memory_space<vmem>>, vector<1x1x1xf32>,
      %cst_20 = arith.constant 0.000000e+00 : f32
      %23 = vector.broadcast %cst_20 : f32 to vector<1x1x1xf32>
      %c0_21 = arith.constant 0 : index
      %c0_22 = arith.constant 0 : index
      %c0_23 = arith.constant 0 : index
      %24 = vector.load %arg4[%c0_21, %c0_22, %c0_23] : memref<1x1x1xf32, #tpu.memory_space<vmem>>, vector<1x1x1xf32>
      tpu.vector_store %arg4[%c0_21, %c0_22, %c0_23], %23 {strides = array<i32>} : memref<1x1x1xf32, #tpu.memory_space<vmem>>, vector<1x1x1xf32>,
    } else {
    }
    %c0 = arith.constant 0 : index
    %c0_1 = arith.constant 0 : index
    %c0_2 = arith.constant 0 : index
    %3 = vector.load %arg2[%c0, %c0_1, %c0_2] : memref<1x16x256xf32, #tpu.memory_space<vmem>>, vector<1x16x256xf32>
    %c0_3 = arith.constant 0 : index
    %c0_4 = arith.constant 0 : index
    %c0_5 = arith.constant 0 : index
    %4 = vector.load %arg3[%c0_3, %c0_4, %c0_5] : memref<1x1x1xf32, #tpu.memory_space<vmem>>, vector<1x1x1xf32>
    %5 = vector.shape_cast %3 : vector<1x16x256xf32> to vector<1x1x16x256xf32>
    %cst = arith.constant dense<0.000000e+00> : vector<1xf32>
    %6 = vector.multi_reduction <add>, %5, %cst [1, 2, 3] : vector<1x1x16x256xf32> to vector<1xf32>
    %7 = vector.shape_cast %6 : vector<1xf32> to vector<1x1x1x1xf32>
    %8 = vector.extract %7[0, 0, 0, 0] : f32 from vector<1x1x1x1xf32>
    %9 = vector.broadcast %8 : f32 to vector<1x1x1xf32>
    %10 = arith.addf %4, %9 : vector<1x1x1xf32>
    %c0_6 = arith.constant 0 : index
    %c0_7 = arith.constant 0 : index
    %c0_8 = arith.constant 0 : index
    %11 = vector.load %arg3[%c0_6, %c0_7, %c0_8] : memref<1x1x1xf32, #tpu.memory_space<vmem>>, vector<1x1x1xf32>
    tpu.vector_store %arg3[%c0_6, %c0_7, %c0_8], %10 {strides = array<i32>} : memref<1x1x1xf32, #tpu.memory_space<vmem>>, vector<1x1x1xf32>,
    %c0_9 = arith.constant 0 : index
    %c0_10 = arith.constant 0 : index
    %c0_11 = arith.constant 0 : index
    %12 = vector.load %arg4[%c0_9, %c0_10, %c0_11] : memref<1x1x1xf32, #tpu.memory_space<vmem>>, vector<1x1x1xf32>
    %13 = arith.mulf %3, %3 : vector<1x16x256xf32>
    %14 = vector.shape_cast %13 : vector<1x16x256xf32> to vector<1x1x16x256xf32>
    %cst_12 = arith.constant dense<0.000000e+00> : vector<1xf32>
    %15 = vector.multi_reduction <add>, %14, %cst_12 [1, 2, 3] : vector<1x1x16x256xf32> to vector<1xf32>
    %16 = vector.shape_cast %15 : vector<1xf32> to vector<1x1x1x1xf32>
    %17 = vector.extract %16[0, 0, 0, 0] : f32 from vector<1x1x1x1xf32>
    %18 = vector.broadcast %17 : f32 to vector<1x1x1xf32>
    %19 = arith.addf %12, %18 : vector<1x1x1xf32>
    %c0_13 = arith.constant 0 : index
    %c0_14 = arith.constant 0 : index
    %c0_15 = arith.constant 0 : index
    %20 = vector.load %arg4[%c0_13, %c0_14, %c0_15] : memref<1x1x1xf32, #tpu.memory_space<vmem>>, vector<1x1x1xf32>
    tpu.vector_store %arg4[%c0_13, %c0_14, %c0_15], %19 {strides = array<i32>} : memref<1x1x1xf32, #tpu.memory_space<vmem>>, vector<1x1x1xf32>,
    return
  }
  func.func @transform_0(%arg0: i32, %arg1: i32) -> (i32, i32, i32) {
    %c0_i32 = arith.constant 0 : i32
    %c0_i32_0 = arith.constant 0 : i32
    return %arg0, %c0_i32, %arg1 : i32, i32, i32
  }
  func.func @transform_1(%arg0: i32, %arg1: i32) -> (i32, i32, i32) {
    %c0_i32 = arith.constant 0 : i32
    %c0_i32_0 = arith.constant 0 : i32
    %c0_i32_1 = arith.constant 0 : i32
    return %arg0, %c0_i32, %c0_i32_0 : i32, i32, i32
  }
  func.func @transform_2(%arg0: i32, %arg1: i32) -> (i32, i32, i32) {
    %c0_i32 = arith.constant 0 : i32
    %c0_i32_0 = arith.constant 0 : i32
    %c0_i32_1 = arith.constant 0 : i32
    return %arg0, %c0_i32, %c0_i32_0 : i32, i32, i32
  }
}

</mosaic_0001>

<llo_original>
// kernel: tpu_custom_call.1
$region0: #{tpu_custom_call.1}
  #allocation0 [shape = 'u32[]', space=smem, size = 0x4, offset = 0x4, fixed_abs, tag = 'smem constant byte address 0x4 - core index']
  #allocation1 [shape = 'u32[144,128]{1,0:T(1,128)}', space=vmem, size = 0x12000, scoped, tag = 'internal scratch']
  %s0 = inlined_call_operand.hbm [shape: f32[2,16,512], index: 0, kind: input, shape index: {}]
  %s1 = inlined_call_operand.vmem [shape: f32[2,1,1], index: 1, kind: output, shape index: {0}]
  %s2 = inlined_call_operand.vmem [shape: f32[2,1,1], index: 2, kind: output, shape index: {1}]
  %3 = xla_tuple %s1, %s2
  %s4 = sld [smem:[#allocation0]]
  $region53: #{tpu_custom_call.1} parent=0
    _
  %s6 = ssub.s32 1, %s4
  %s7 = scalar_select 0, %s6, %s4
  $region1: #{tpu_custom_call.1} parent=0
    #allocation2 [shape = 'u8[32768]{0}', space=vmem, size = 0x8000, scoped, tag = 'input window, operand 0']
    #allocation3 [shape = 's32[2]{0}', space=sflag, size = 0x8, scoped, tag = 'scoped memory for tpu_custom_call.1']
    %8 = vsyncpa [#allocation3], 0
    %s9 = scalar_lea.sflag [#allocation3], 1
    %10 = vsyncpa %s9, 0
    loop: start=0, step=1, limit=6
    $region2: #{tpu_custom_call.1} parent=1 // loop_pre_header
      _
    $region3: #{tpu_custom_call.1} parent=1 // loop_header
      %s12 = sphi 0, %s16
      %p13 = scmp.ge.s32.totalorder %s12, 6
      %s19 = sphi 0, %s31
      %s20 = sphi 0, %s27
      %s21 = sphi 0, %s19
      %s22 = sphi 0, %s20
      %s23 = sphi 0, %s21
      %s24 = sphi 0, %s22
      %s36 = sphi 0, %s38
      %s39 = sphi 0, %s36
      %s40 = sphi 0, %s39
      %s56 = sphi 0, %s40
      %s62 = sphi 0, %s64
      %s65 = sphi 0, %s62
      %s66 = sphi 0, %s65
      %s82 = sphi 0, %s66
      %s88 = sphi 0, %s90
      %s91 = sphi 0, %s88
      %s92 = sphi 0, %s91
      %s108 = sphi 0, %s92
    $region4: #{tpu_custom_call.1} parent=1 // loop_header_branch
      %15 = sbr.rel (%p13) target = $region8
    $region5: #{tpu_custom_call.1} parent=1 // loop_body
      %s17 = ssub.s32 %s12, 1
      %s18 = ssub.s32 %s12, 2
      %s25 = sadd.s32 1, %s20
      %p26 = scmp.ge.s32.totalorder %s25, 2
      %s27 = scalar_select %p26, 0, %s25
      %s28 = sadd.s32 1, %s19
      %s29 = scalar_select %p26, %s28, %s19
      %p30 = scmp.ge.s32.totalorder %s29, 2
      %s31 = scalar_select %p30, 0, %s29
      %s32 = ssub.s32 %s19, %s31
      %s33 = ssub.s32 %s20, %s27
      %s34 = sor.u32 %s32, %s33
      %p35 = scmp.eq.s32.totalorder %s34, 0
      %s37 = sadd.s32 %s36, 1
      %s38 = scalar_select %p35, %s36, %s37
      %p41 = pneg %p35
      %p42 = scmp.eq.s32.totalorder %s12, 3
      %p43 = por %p41, %p42
      %p44 = scmp.ne.s32.totalorder %s36, %s39
      %p45 = scmp.eq.s32.totalorder %s12, 0
      %p46 = por %p44, %p45
      %p47 = scmp.ne.s32.totalorder %s36, %s39
      %p48 = scmp.eq.s32.totalorder %s17, 3
      %p49 = por %p47, %p48
      %p50 = scmp.ne.s32.totalorder %s39, %s40
      %p51 = scmp.eq.s32.totalorder %s17, 0
      %p52 = por %p50, %p51
      %p53 = scmp.ne.s32.totalorder %s39, %s40
      %p54 = scmp.eq.s32.totalorder %s18, 3
      %p55 = por %p53, %p54
      %p57 = scmp.ne.s32.totalorder %s40, %s56
      %p58 = scmp.eq.s32.totalorder %s18, 0
      %p59 = por %p57, %p58
      %s60 = ssub.s32 %s19, %s31
      %p61 = scmp.eq.s32.totalorder %s60, 0
      %s63 = sadd.s32 %s62, 1
      %s64 = scalar_select %p61, %s62, %s63
      %p67 = pneg %p61
      %p68 = scmp.eq.s32.totalorder %s12, 3
      %p69 = por %p67, %p68
      %p70 = scmp.ne.s32.totalorder %s62, %s65
      %p71 = scmp.eq.s32.totalorder %s12, 0
      %p72 = por %p70, %p71
      %p73 = scmp.ne.s32.totalorder %s62, %s65
      %p74 = scmp.eq.s32.totalorder %s17, 3
      %p75 = por %p73, %p74
      %p76 = scmp.ne.s32.totalorder %s65, %s66
      %p77 = scmp.eq.s32.totalorder %s17, 0
      %p78 = por %p76, %p77
      %p79 = scmp.ne.s32.totalorder %s65, %s66
      %p80 = scmp.eq.s32.totalorder %s18, 3
      %p81 = por %p79, %p80
      %p83 = scmp.ne.s32.totalorder %s66, %s82
      %p84 = scmp.eq.s32.totalorder %s18, 0
      %p85 = por %p83, %p84
      %s86 = ssub.s32 %s19, %s31
      %p87 = scmp.eq.s32.totalorder %s86, 0
      %s89 = sadd.s32 %s88, 1
      %s90 = scalar_select %p87, %s88, %s89
      %p93 = pneg %p87
      %p94 = scmp.eq.s32.totalorder %s12, 3
      %p95 = por %p93, %p94
      %p96 = scmp.ne.s32.totalorder %s88, %s91
      %p97 = scmp.eq.s32.totalorder %s12, 0
      %p98 = por %p96, %p97
      %p99 = scmp.ne.s32.totalorder %s88, %s91
      %p100 = scmp.eq.s32.totalorder %s17, 3
      %p101 = por %p99, %p100
      %p102 = scmp.ne.s32.totalorder %s91, %s92
      %p103 = scmp.eq.s32.totalorder %s17, 0
      %p104 = por %p102, %p103
      %p105 = scmp.ne.s32.totalorder %s91, %s92
      %p106 = scmp.eq.s32.totalorder %s18, 3
      %p107 = por %p105, %p106
      %p109 = scmp.ne.s32.totalorder %s92, %s108
      %p110 = scmp.eq.s32.totalorder %s18, 0
      %p111 = por %p109, %p110
      %p112 = scmp.le.s32.totalorder 1, %s12
      %p113 = scmp.lt.s32.totalorder %s12, 5
      %p114 = pnand %p112, %p113
      %p115 = pneg %p114
      // Predicated region
      $region9: #{tpu_custom_call.1} parent=5 // pred_check
        _
      $region10: #{tpu_custom_call.1} parent=5 // pred_check_branch
        %117 = sbr.rel (%p114) target = $region12
      $region11: #{tpu_custom_call.1} parent=5 // pred_region
        %s118 = ssub.s32 %s12, 1
      $region12: #{tpu_custom_call.1} parent=5 // pred_fallthru
        _
      %p119 = scmp.lt.s32.totalorder %s12, 4
      // Predicated region
      $region13: #{tpu_custom_call.1} parent=5 // pred_check
        %p120 = pneg %p119
      $region14: #{tpu_custom_call.1} parent=5 // pred_check_branch
        %122 = sbr.rel (%p120) target = $region16
      $region15: #{tpu_custom_call.1} parent=5 // pred_region
        // Predicated region
        $region17: #{tpu_custom_call.1} parent=15 // pred_check
          %p123 = pneg %p46
        $region18: #{tpu_custom_call.1} parent=15 // pred_check_branch
          %125 = sbr.rel (%p123) target = $region20
        $region19: #{tpu_custom_call.1} parent=15 // pred_region
          %s126 = sand.u32 %s36, 1
          %s127 = scalar_lea.sflag [#allocation3], %s126
          %s128 = sand.u32 %s36, 1
          %s129 = smul.addr %s128, 32
          %s130 = scalar_lea.vmem [#allocation2], %s129
          %s131 = smul.u32 2, %s20
          %s133 = ssub.s32 512, 512
          %134 = vsyncadd %s127, %s133
          %s135 = smul.addr %s19, 8
          %s136 = sadd.s32 %s131, %s135
          %s137 = smul.addr %s136, 128
          %s138 = scalar_lea.hbm %s0, %s137
          %s139 = sshll.u32 %s130, 4
          %s140 = int_to_ptr.vmem [resolvable:$true] %s139
          %145 = dma.hbm_to_vmem [thread:$0]  %s138, 512, %s140, %s127, 512, 256, 16
        $region20: #{tpu_custom_call.1} parent=15 // pred_fallthru
          _
      $region16: #{tpu_custom_call.1} parent=5 // pred_fallthru
        _
      %p146 = scmp.le.s32.totalorder 1, %s12
      %p147 = scmp.lt.s32.totalorder %s12, 5
      %p148 = pnand %p146, %p147
      %p149 = pneg %p148
      // Predicated region
      $region21: #{tpu_custom_call.1} parent=5 // pred_check
        _
      $region22: #{tpu_custom_call.1} parent=5 // pred_check_branch
        %151 = sbr.rel (%p148) target = $region24
      $region23: #{tpu_custom_call.1} parent=5 // pred_region
        %s152 = ssub.s32 %s12, 1
        %s153 = sand.u32 %s39, 1
        %s154 = scalar_lea.sflag [#allocation3], %s153
        %s155 = sand.u32 %s39, 1
        %s156 = smul.addr %s155, 32
        %s157 = scalar_lea.vmem [#allocation2], %s156
        // Predicated region
        $region25: #{tpu_custom_call.1} parent=23 // pred_check
          %p158 = pneg %p52
        $region26: #{tpu_custom_call.1} parent=23 // pred_check_branch
          %160 = sbr.rel (%p158) target = $region28
        $region27: #{tpu_custom_call.1} parent=23 // pred_region
          %161 = dma.done %s154, 512
        $region28: #{tpu_custom_call.1} parent=23 // pred_fallthru
          _
        %s162 = sand.u32 %s39, 1
        %s163 = scalar_lea.sflag [#allocation3], %s162
        %s164 = sand.u32 %s39, 1
        %s165 = smul.addr %s164, 32
        %s166 = scalar_lea.vmem [#allocation2], %s165
        %p167 = pneg %p52
        %p168 = pneg %p49
        %p169 = pneg %p78
        %p170 = pneg %p75
        %p171 = scmp.lt.s32.totalorder %s21, 1
        %s172 = scalar_select %p171, %s21, 1
        %s173 = scalar_lea.vmem %s1, %s172
        %p174 = pneg %p104
        %p175 = pneg %p101
        %p176 = scmp.lt.s32.totalorder %s21, 1
        %s177 = scalar_select %p176, %s21, 1
        %s178 = scalar_lea.vmem %s2, %s177
        %s179 = smul.u32 2, %s22
        %p180 = scmp.lt.s32.totalorder %s21, 1
        %s181 = scalar_select %p180, %s21, 1
        %s182 = scalar_lea.vmem %s1, %s181
        %p183 = scmp.lt.s32.totalorder %s21, 1
        %s184 = scalar_select %p183, %s21, 1
        %s185 = scalar_lea.vmem %s2, %s184
        %p186 = scmp.eq.s32.totalorder %s22, 0
        // Predicated region
        $region29: #{tpu_custom_call.1} parent=23 // pred_check
          %p187 = pneg %p186
        $region30: #{tpu_custom_call.1} parent=23 // pred_check_branch
          %189 = sbr.rel (%p187) target = $region32
        $region31: #{tpu_custom_call.1} parent=23 // pred_region
          %vm190 = vcmask 0
          %191 = vst.msk [vmem:[%s182] sm:$0x1] %vm190, 0.0
          %192 = vst.msk [vmem:[%s185] sm:$0x1] %vm190, 0.0
        $region32: #{tpu_custom_call.1} parent=23 // pred_fallthru
          _
        %v193 = vld [vmem:[%s157] sm:$0xff]
        %v194 = vld [vmem:[%s157 + $0x8] sm:$0xff]
        %v195 = vld [vmem:[%s157 + $0x10] sm:$0xff]
        %v196 = vld [vmem:[%s157 + $0x18] sm:$0xff]
        %v197 = vld [vmem:[%s182] sm:$0x1]
        %v198 = vadd.f32 %v193, %v194
        %v199 = vadd.f32 %v198, %v195
        %v200 = vadd.f32 %v199, %v196
        %201 = vadd.xlane.f32.xlu0 %v200
        %v202 = vpop.xlane.xlu0 %201
        %v203 = vrot.slane %v202, 4
        %v204 = vadd.f32 %v202, %v203
        %v205 = vrot.slane %v204, 2
        %v206 = vadd.f32 %v204, %v205
        %v207 = vrot.slane %v206, 1
        %v208 = vadd.f32 %v206, %v207
        %s209 = vtos %v208
        %v210 = vstv %s209
        %v211 = vadd.f32 %v197, %v210
        %vm212 = vcmask 0
        %213 = vst.msk [vmem:[%s182] sm:$0x1] %vm212, %v211
        %v214 = vld [vmem:[%s185] sm:$0x1]
        %v215 = vmul.f32 %v193, %v193
        %v216 = vmul.f32 %v194, %v194
        %v217 = vmul.f32 %v195, %v195
        %v218 = vmul.f32 %v196, %v196
        %v219 = vadd.f32 %v215, %v216
        %v220 = vadd.f32 %v219, %v217
        %v221 = vadd.f32 %v220, %v218
        %222 = vadd.xlane.f32.xlu0 %v221
        %v223 = vpop.xlane.xlu0 %222
        %v224 = vrot.slane %v223, 4
        %v225 = vadd.f32 %v223, %v224
        %v226 = vrot.slane %v225, 2
        %v227 = vadd.f32 %v225, %v226
        %v228 = vrot.slane %v227, 1
        %v229 = vadd.f32 %v227, %v228
        %s230 = vtos %v229
        %v231 = vstv %s230
        %v232 = vadd.f32 %v214, %v231
        %233 = vst.msk [vmem:[%s185] sm:$0x1] %vm212, %v232
        %p234 = scmp.lt.s32.totalorder %s21, 1
        %s235 = scalar_select %p234, %s21, 1
        %s236 = scalar_lea.vmem %s1, %s235
        %p237 = scmp.lt.s32.totalorder %s21, 1
        %s238 = scalar_select %p237, %s21, 1
        %s239 = scalar_lea.vmem %s2, %s238
        // Predicated region
        $region33: #{tpu_custom_call.1} parent=23 // pred_check
          %p240 = pneg %p75
        $region34: #{tpu_custom_call.1} parent=23 // pred_check_branch
          %242 = sbr.rel (%p240) target = $region36
        $region35: #{tpu_custom_call.1} parent=23 // pred_region
          _
        $region36: #{tpu_custom_call.1} parent=23 // pred_fallthru
          _
        // Predicated region
        $region37: #{tpu_custom_call.1} parent=23 // pred_check
          %p243 = pneg %p101
        $region38: #{tpu_custom_call.1} parent=23 // pred_check_branch
          %245 = sbr.rel (%p243) target = $region40
        $region39: #{tpu_custom_call.1} parent=23 // pred_region
          _
        $region40: #{tpu_custom_call.1} parent=23 // pred_fallthru
          _
      $region24: #{tpu_custom_call.1} parent=5 // pred_fallthru
        _
      %p246 = scmp.le.s32.totalorder 2, %s12
      // Predicated region
      $region41: #{tpu_custom_call.1} parent=5 // pred_check
        %p247 = pneg %p246
      $region42: #{tpu_custom_call.1} parent=5 // pred_check_branch
        %249 = sbr.rel (%p247) target = $region44
      $region43: #{tpu_custom_call.1} parent=5 // pred_region
        %s250 = ssub.s32 %s12, 2
        // Predicated region
        $region45: #{tpu_custom_call.1} parent=43 // pred_check
          %p251 = pneg %p81
        $region46: #{tpu_custom_call.1} parent=43 // pred_check_branch
          %253 = sbr.rel (%p251) target = $region48
        $region47: #{tpu_custom_call.1} parent=43 // pred_region
          %p254 = scmp.lt.s32.totalorder %s23, 1
          %s255 = scalar_select %p254, %s23, 1
          %s256 = scalar_lea.vmem %s1, %s255
        $region48: #{tpu_custom_call.1} parent=43 // pred_fallthru
          _
        // Predicated region
        $region49: #{tpu_custom_call.1} parent=43 // pred_check
          %p257 = pneg %p107
        $region50: #{tpu_custom_call.1} parent=43 // pred_check_branch
          %259 = sbr.rel (%p257) target = $region52
        $region51: #{tpu_custom_call.1} parent=43 // pred_region
          %p260 = scmp.lt.s32.totalorder %s23, 1
          %s261 = scalar_select %p260, %s23, 1
          %s262 = scalar_lea.vmem %s2, %s261
        $region52: #{tpu_custom_call.1} parent=43 // pred_fallthru
          _
      $region44: #{tpu_custom_call.1} parent=5 // pred_fallthru
        _
    $region6: #{tpu_custom_call.1} parent=1 // loop_footer
      %s16 = sadd.s32 1, %s12
    $region7: #{tpu_custom_call.1} parent=1 // loop_footer_branch
      %11 = sbr.rel target = $region3
    $region8: #{tpu_custom_call.1} parent=1 // loop_exit
      _
    %263 = vsyncpa [#allocation3], 1
    %s264 = scalar_lea.sflag [#allocation3], 1
    %265 = vsyncpa %s264, 1

</llo_original>
